<compile_context>
chip_gen: v5e
topology: v5e:2x2
jax: 0.10.0
libtpu: 0.0.40
codegen_flags: <defaults>
</compile_context>

<pallas_src>
import functools
import math

import jax
import jax.numpy as jnp
from jax.experimental import pallas as pl
from jax.experimental.pallas import tpu as pltpu

_EPS = 1e-6
_LOG_EPS = math.log(_EPS)  # target-lane (1e-6 * log 1e-6) term of the reference


def _nkd_kernel(labels_ref, s_ref, t_ref, loss_ref, *, alpha):
    # s_ref / t_ref: (tb, C) student / teacher logits (any float dtype)
    # labels_ref:    (tb, 1) int32
    # loss_ref:      (tb, 1) f32 per-sample loss
    s = s_ref[...].astype(jnp.float32)
    t = t_ref[...].astype(jnp.float32)
    labels = labels_ref[...]                                   # (tb, 1) int32

    col = jax.lax.broadcasted_iota(jnp.int32, s.shape, 1)      # (tb, C)
    onehot = (col == labels).astype(jnp.float32)               # target mask
    nt = 1.0 - onehot                                          # non-target mask

    # --- true-class logits (per row) ----------------------------------------
    s_true = jnp.sum(s * onehot, axis=1, keepdims=True)
    t_true = jnp.sum(t * onehot, axis=1, keepdims=True)

    # --- single stable softmax pass per input (only 2 full-width exps) ------
    s_max = jnp.max(s, axis=1, keepdims=True)
    t_max = jnp.max(t, axis=1, keepdims=True)
    s_shift = s - s_max
    t_shift = t - t_max
    s_exp = jnp.exp(s_shift)                                   # (tb, C)
    t_exp = jnp.exp(t_shift)                                   # (tb, C)

    # Non-target partition functions via the mask (exact, no cancellation),
    # full partition functions recovered per-row (cheap scalar adds).
    s_exp_nt = s_exp * nt
    t_exp_nt = t_exp * nt
    z_s_nt = jnp.sum(s_exp_nt, axis=1, keepdims=True)
    z_t_nt = jnp.sum(t_exp_nt, axis=1, keepdims=True)
    s_exp_true = jnp.exp(s_true - s_max)                       # per-row EUP
    t_exp_true = jnp.exp(t_true - t_max)
    z_s = z_s_nt + s_exp_true
    z_t = z_t_nt + t_exp_true

    # --- target-class terms --------------------------------------------------
    p_t = t_exp_true / z_t                                     # teacher prob of true class
    log_q_t = (s_true - s_max) - jnp.log(z_s)                  # log student prob of true class

    # --- non-target cross-entropy in log-softmax form ------------------------
    # log q_hat_j = (s_j - s_max) - log(Z_s_nt) on non-target lanes; the target
    # lane is excluded by t_exp_nt being zero there.
    log_q_hat = s_shift - jnp.log(z_s_nt)                      # (tb, C), no full-width log/div
    inner = jnp.sum(t_exp_nt * log_q_hat, axis=1, keepdims=True)
    # + exact target-lane contribution of the reference (1e-6 * log 1e-6).
    cross = inner / z_t_nt + _EPS * _LOG_EPS

    loss_ref[...] = -(1.0 + p_t) * log_q_t - alpha * cross


def _choose_tb(B, C, itemsize):
    """Pick a batch-tile size that fits a conservative VMEM budget."""
    sub = 8 if itemsize >= 4 else 16          # sublane tile: 8 for f32, 16 for bf16
    # Per tile row: double-buffered student+teacher input tiles in the input
    # dtype, plus ~6 full-width f32 temporaries live inside the kernel body.
    bytes_per_row = 2 * 2 * C * itemsize + 6 * C * 4
    budget = 24 << 20                          # below the scoped VMEM we request, on every gen
    cap = max(sub, budget // max(bytes_per_row, 1))
    cap = min(cap, 1024, B)
    cap = max(sub, (cap // sub) * sub)
    if cap >= B:
        # Whole batch fits comfortably: still prefer >=2 grid steps so both
        # v7x TensorCores get work under dimension_semantics=("parallel",).
        half = B // 2
        if B % 2 == 0 and half % sub == 0:
            return half
        return B
    # Largest tb <= cap that divides B and respects the (8/16, 128) tiling.
    for t in range(cap, sub - 1, -sub):
        if B % t == 0:
            return t
    return B  # no well-tiled divisor fits the budget; fall back to one tile


def nkd_loss(input_logits, target_logits, true_labels, alpha=1.0, *, tb=None):
    """NKD loss. input_logits/target_logits: [B, C]; true_labels: int [B]."""
    B, C = input_logits.shape
    itemsize = jnp.dtype(input_logits.dtype).itemsize
    sub = 8 if itemsize >= 4 else 16
    if tb is None:
        tb = _choose_tb(B, C, itemsize)
    assert B % tb == 0, f"tb={tb} must divide B={B}"
    assert tb % sub == 0 or tb == B, (
        f"tb={tb} must be a multiple of {sub} (sublane tile) or equal to B={B}")

    labels2d = true_labels.astype(jnp.int32).reshape(B, 1)

    per_row = pl.pallas_call(
        functools.partial(_nkd_kernel, alpha=float(alpha)),
        out_shape=jax.ShapeDtypeStruct((B, 1), jnp.float32),
        grid_spec=pltpu.PrefetchScalarGridSpec(
            num_scalar_prefetch=0,
            grid=(B // tb,),
            in_specs=[
                pl.BlockSpec((tb, 1), lambda i: (i, 0)),   # labels
                pl.BlockSpec((tb, C), lambda i: (i, 0)),   # student logits
                pl.BlockSpec((tb, C), lambda i: (i, 0)),   # teacher logits
            ],
            out_specs=pl.BlockSpec((tb, 1), lambda i: (i, 0)),
        ),
        compiler_params=pltpu.CompilerParams(
            dimension_semantics=("parallel",),
            vmem_limit_bytes=48 * 1024 * 1024,
        ),
    )(labels2d, input_logits, target_logits)

    # TODO(synk): final batch mean kept in JAX (tiny [B,1] reduction) so the
    # grid can stay fully "parallel" across v7x TensorCores.
    return jnp.mean(per_row)


def _nkd_ref(input_logits, target_logits, true_labels, alpha=1.0):
    """Pure-JAX reference mirroring the PyTorch forward."""
    B, C = input_logits.shape
    mask = jax.nn.one_hot(true_labels, C, dtype=jnp.float32)
    il = input_logits.astype(jnp.float32)
    tl = target_logits.astype(jnp.float32)
    p_t = (jnp.exp(jnp.sum(tl * mask, axis=1, keepdims=True))
           / jnp.sum(jnp.exp(tl), axis=1, keepdims=True))
    q_t = (jnp.exp(jnp.sum(il * mask, axis=1, keepdims=True))
           / jnp.sum(jnp.exp(il), axis=1, keepdims=True))
    p_hat = jax.nn.softmax(tl - 1000.0 * mask, axis=1) + 1e-6 * mask
    q_hat = jax.nn.softmax(il - 1000.0 * mask, axis=1) + 1e-6 * mask
    return jnp.mean(-(1.0 + p_t[:, 0]) * jnp.log(q_t[:, 0])
                    - alpha * jnp.sum(p_hat * jnp.log(q_hat), axis=1))


if __name__ == "__main__":
    key = jax.random.PRNGKey(0)
    k1, k2, k3 = jax.random.split(key, 3)
    B, C = 8, 32
    student_logits = jax.random.normal(k1, (B, C), dtype=jnp.float32)
    teacher_logits = jax.random.normal(k2, (B, C), dtype=jnp.float32)
    labels = jax.random.randint(k3, (B,), 0, C, dtype=jnp.int32)

    out = nkd_loss(student_logits, teacher_logits, labels, alpha=1.0)
    out = jax.block_until_ready(out)

    ref = _nkd_ref(student_logits, teacher_logits, labels, alpha=1.0)
    assert jnp.allclose(out, ref, rtol=1e-4, atol=1e-5), (out, ref)

    print("KERNEL_OK")
</pallas_src>

<mosaic_0001>
module attributes {stable_mosaic.version = 11 : i64} {
  func.func @_nkd_kernel(%arg0: i32, %arg1: memref<8x1xi32, #tpu.memory_space<vmem>>, %arg2: memref<8x32xf32, #tpu.memory_space<vmem>>, %arg3: memref<8x32xf32, #tpu.memory_space<vmem>>, %arg4: memref<8x1xf32, #tpu.memory_space<vmem>>) attributes {dimension_semantics = [#tpu.dimension_semantics<parallel>], iteration_bounds = array<i64: 1>, scalar_prefetch = 0 : i64, scratch_operands = 0 : i64, tpu.core_type = #tpu.core_type<tc>, window_params = [{transform_indices = @transform_0, window_bounds = array<i64: 8, 1>}, {transform_indices = @transform_1, window_bounds = array<i64: 8, 32>}, {transform_indices = @transform_2, window_bounds = array<i64: 8, 32>}, {transform_indices = @transform_3, window_bounds = array<i64: 8, 1>}]} {
    %c0 = arith.constant 0 : index
    %c0_0 = arith.constant 0 : index
    %0 = vector.load %arg2[%c0, %c0_0] : memref<8x32xf32, #tpu.memory_space<vmem>>, vector<8x32xf32>
    %c0_1 = arith.constant 0 : index
    %c0_2 = arith.constant 0 : index
    %1 = vector.load %arg3[%c0_1, %c0_2] : memref<8x32xf32, #tpu.memory_space<vmem>>, vector<8x32xf32>
    %c0_3 = arith.constant 0 : index
    %c0_4 = arith.constant 0 : index
    %2 = vector.load %arg1[%c0_3, %c0_4] : memref<8x1xi32, #tpu.memory_space<vmem>>, vector<8x1xi32>
    %3 = tpu.iota {dimensions = array<i32: 1>} : vector<8x32xi32>
    %4 = vector.broadcast %2 : vector<8x1xi32> to vector<8x32xi32>
    %5 = arith.cmpi eq, %3, %4 : vector<8x32xi32>
    %6 = arith.extui %5 : vector<8x32xi1> to vector<8x32xi32>
    %7 = arith.sitofp %6 : vector<8x32xi32> to vector<8x32xf32>
    %cst = arith.constant 1.000000e+00 : f32
    %8 = vector.broadcast %cst : f32 to vector<8x32xf32>
    %9 = arith.subf %8, %7 : vector<8x32xf32>
    %10 = arith.mulf %0, %7 : vector<8x32xf32>
    %cst_5 = arith.constant dense<0.000000e+00> : vector<8xf32>
    %11 = vector.multi_reduction <add>, %10, %cst_5 [1] : vector<8x32xf32> to vector<8xf32>
    %12 = vector.shape_cast %11 : vector<8xf32> to vector<8x1xf32>
    %13 = arith.mulf %1, %7 : vector<8x32xf32>
    %cst_6 = arith.constant dense<0.000000e+00> : vector<8xf32>
    %14 = vector.multi_reduction <add>, %13, %cst_6 [1] : vector<8x32xf32> to vector<8xf32>
    %15 = vector.shape_cast %14 : vector<8xf32> to vector<8x1xf32>
    %cst_7 = arith.constant dense<0xFF800000> : vector<8xf32>
    %16 = vector.multi_reduction <maximumf>, %0, %cst_7 [1] : vector<8x32xf32> to vector<8xf32>
    %17 = vector.shape_cast %16 : vector<8xf32> to vector<8x1xf32>
    %cst_8 = arith.constant dense<0xFF800000> : vector<8xf32>
    %18 = vector.multi_reduction <maximumf>, %1, %cst_8 [1] : vector<8x32xf32> to vector<8xf32>
    %19 = vector.shape_cast %18 : vector<8xf32> to vector<8x1xf32>
    %20 = vector.broadcast %17 : vector<8x1xf32> to vector<8x32xf32>
    %21 = arith.subf %0, %20 : vector<8x32xf32>
    %22 = vector.broadcast %19 : vector<8x1xf32> to vector<8x32xf32>
    %23 = arith.subf %1, %22 : vector<8x32xf32>
    %24 = math.exp %21 : vector<8x32xf32>
    %25 = math.exp %23 : vector<8x32xf32>
    %26 = arith.mulf %24, %9 : vector<8x32xf32>
    %27 = arith.mulf %25, %9 : vector<8x32xf32>
    %cst_9 = arith.constant dense<0.000000e+00> : vector<8xf32>
    %28 = vector.multi_reduction <add>, %26, %cst_9 [1] : vector<8x32xf32> to vector<8xf32>
    %29 = vector.shape_cast %28 : vector<8xf32> to vector<8x1xf32>
    %cst_10 = arith.constant dense<0.000000e+00> : vector<8xf32>
    %30 = vector.multi_reduction <add>, %27, %cst_10 [1] : vector<8x32xf32> to vector<8xf32>
    %31 = vector.shape_cast %30 : vector<8xf32> to vector<8x1xf32>
    %32 = arith.subf %12, %17 : vector<8x1xf32>
    %33 = math.exp %32 : vector<8x1xf32>
    %34 = arith.subf %15, %19 : vector<8x1xf32>
    %35 = math.exp %34 : vector<8x1xf32>
    %36 = arith.addf %29, %33 : vector<8x1xf32>
    %37 = arith.addf %31, %35 : vector<8x1xf32>
    %38 = arith.divf %35, %37 : vector<8x1xf32>
    %39 = arith.subf %12, %17 : vector<8x1xf32>
    %40 = math.log %36 : vector<8x1xf32>
    %41 = arith.subf %39, %40 : vector<8x1xf32>
    %42 = math.log %29 : vector<8x1xf32>
    %43 = vector.broadcast %42 : vector<8x1xf32> to vector<8x32xf32>
    %44 = arith.subf %21, %43 : vector<8x32xf32>
    %45 = arith.mulf %27, %44 : vector<8x32xf32>
    %cst_11 = arith.constant dense<0.000000e+00> : vector<8xf32>
    %46 = vector.multi_reduction <add>, %45, %cst_11 [1] : vector<8x32xf32> to vector<8xf32>
    %47 = vector.shape_cast %46 : vector<8xf32> to vector<8x1xf32>
    %48 = arith.divf %47, %31 : vector<8x1xf32>
    %cst_12 = arith.constant -1.3815511E-5 : f32
    %49 = vector.broadcast %cst_12 : f32 to vector<8x1xf32>
    %50 = arith.addf %48, %49 : vector<8x1xf32>
    %cst_13 = arith.constant 1.000000e+00 : f32
    %51 = vector.broadcast %cst_13 : f32 to vector<8x1xf32>
    %52 = arith.addf %51, %38 : vector<8x1xf32>
    %cst_14 = arith.constant 0.000000e+00 : f32
    %53 = vector.broadcast %cst_14 : f32 to vector<8x1xf32>
    %54 = arith.subf %53, %52 : vector<8x1xf32>
    %55 = arith.mulf %54, %41 : vector<8x1xf32>
    %cst_15 = arith.constant 1.000000e+00 : f32
    %56 = vector.broadcast %cst_15 : f32 to vector<8x1xf32>
    %57 = arith.mulf %56, %50 : vector<8x1xf32>
    %58 = arith.subf %55, %57 : vector<8x1xf32>
    %c0_16 = arith.constant 0 : index
    %c0_17 = arith.constant 0 : index
    %59 = vector.load %arg4[%c0_16, %c0_17] : memref<8x1xf32, #tpu.memory_space<vmem>>, vector<8x1xf32>
    tpu.vector_store %arg4[%c0_16, %c0_17], %58 {strides = array<i32>} : memref<8x1xf32, #tpu.memory_space<vmem>>, vector<8x1xf32>,
    return
  }
  func.func @transform_0(%arg0: i32) -> (i32, i32) {
    %c0_i32 = arith.constant 0 : i32
    %c0_i32_0 = arith.constant 0 : i32
    return %arg0, %c0_i32 : i32, i32
  }
  func.func @transform_1(%arg0: i32) -> (i32, i32) {
    %c0_i32 = arith.constant 0 : i32
    %c0_i32_0 = arith.constant 0 : i32
    return %arg0, %c0_i32 : i32, i32
  }
  func.func @transform_2(%arg0: i32) -> (i32, i32) {
    %c0_i32 = arith.constant 0 : i32
    %c0_i32_0 = arith.constant 0 : i32
    return %arg0, %c0_i32 : i32, i32
  }
  func.func @transform_3(%arg0: i32) -> (i32, i32) {
    %c0_i32 = arith.constant 0 : i32
    %c0_i32_0 = arith.constant 0 : i32
    return %arg0, %c0_i32 : i32, i32
  }
}

</mosaic_0001>

<llo_original>
// kernel: tpu_custom_call.1
$region0: #{tpu_custom_call.1}
  #allocation0 [shape = 'u32[]', space=smem, size = 0x4, offset = 0x4, fixed_abs, tag = 'smem constant byte address 0x4 - core index']
  #allocation1 [shape = 'u32[72,128]{1,0:T(1,128)}', space=vmem, size = 0x9000, scoped, tag = 'internal scratch']
  %s0 = inlined_call_operand.vmem [shape: s32[8,1], index: 0, kind: input, shape index: {}]
  %s1 = inlined_call_operand.vmem [shape: f32[8,32], index: 1, kind: input, shape index: {}]
  %s2 = inlined_call_operand.hbm [shape: f32[8,32], index: 2, kind: input, shape index: {}]
  %s3 = inlined_call_operand.vmem [shape: f32[8,1], index: 3, kind: output, shape index: {}]
  %s4 = sld [smem:[#allocation0]]
  $region26: #{tpu_custom_call.1} parent=0
    _
  %s6 = ssub.s32 1, %s4
  %s7 = scalar_select 0, %s6, %s4
  $region1: #{tpu_custom_call.1} parent=0
    #allocation2 [shape = 'u8[4096]{0}', space=vmem, size = 0x1000, scoped, tag = 'input window, operand 2, single buffered']
    #allocation3 [shape = 's32[1]{0}', space=sflag, size = 0x4, scoped, tag = 'scoped memory for tpu_custom_call.1']
    %8 = vsyncpa [#allocation3], 0
    // Predicated region
    $region2: #{tpu_custom_call.1} parent=1 // pred_check
      _
    $region3: #{tpu_custom_call.1} parent=1 // pred_check_branch
      %10 = sbr.rel (0) target = $region5
    $region4: #{tpu_custom_call.1} parent=1 // pred_region
      _
    $region5: #{tpu_custom_call.1} parent=1 // pred_fallthru
      _
    // Predicated region
    $region6: #{tpu_custom_call.1} parent=1 // pred_check
      _
    $region7: #{tpu_custom_call.1} parent=1 // pred_check_branch
      %12 = sbr.rel (0) target = $region9
    $region8: #{tpu_custom_call.1} parent=1 // pred_region
      _
    $region9: #{tpu_custom_call.1} parent=1 // pred_fallthru
      _
    // Predicated region
    $region10: #{tpu_custom_call.1} parent=1 // pred_check
      _
    $region11: #{tpu_custom_call.1} parent=1 // pred_check_branch
      %14 = sbr.rel (0) target = $region13
    $region12: #{tpu_custom_call.1} parent=1 // pred_region
      %16 = vsyncadd [#allocation3], 0
      %s18 = sshll.u32 %s2, 4
      %s19 = int_to_ptr.hbm [resolvable:$true] %s18
      %s20 = sshll.u32 [#allocation2], 4
      %s21 = int_to_ptr.vmem [resolvable:$true] %s20
      %23 = dma.hbm_to_vmem [thread:$0]  %s19, 128, %s21, [#allocation3]
    $region13: #{tpu_custom_call.1} parent=1 // pred_fallthru
      _
    // Predicated region
    $region14: #{tpu_custom_call.1} parent=1 // pred_check
      _
    $region15: #{tpu_custom_call.1} parent=1 // pred_check_branch
      %25 = sbr.rel (0) target = $region17
    $region16: #{tpu_custom_call.1} parent=1 // pred_region
      %27 = dma.done [#allocation3], 128
    $region17: #{tpu_custom_call.1} parent=1 // pred_fallthru
      _
    %v28 = vld [vmem:[%s1] sm:$0xff]
    %v29 = vld [vmem:[#allocation2] sm:$0xff]
    %v30 = vld [vmem:[%s0] sm:$0xff]
    %v31 = vlaneseq
    %v32 = vand.u32 %v31, 127
    %33 = vset.pattern.permute.xlu0 0
    %34 = vperm.xlu0 %33, %v30
    %v35 = vpop.permute.xlu0 %34
    %vm36 = vcmp.eq.s32.totalorder %v32, %v35
    %v37 = vsel %vm36, 1, 0
    %v38 = vcvt.s32.f32 %v37
    %v39 = vsub.f32 1.0, %v38
    %v40 = vmul.f32 %v28, %v38
    %vm41 = vcmask 261120
    %v42 = vsel %vm41, %v40, 0.0
    %43 = vadd.xlane.f32.xlu0 %v42
    %v44 = vpop.xlane.xlu0 %43
    %v45 = vmul.f32 %v29, %v38
    %v46 = vsel %vm41, %v45, 0.0
    %47 = vadd.xlane.f32.xlu0 %v46
    %v48 = vpop.xlane.xlu0 %47
    %v49 = vsel %vm41, %v28, -inf
    %50 = vmax.xlane.f32.xlu0 %v49
    %v51 = vpop.xlane.xlu0 %50
    %v52 = vsel %vm41, %v29, -inf
    %53 = vmax.xlane.f32.xlu0 %v52
    %v54 = vpop.xlane.xlu0 %53
    %v55 = vsub.f32 %v28, %v51
    %v56 = vsub.f32 %v29, %v54
    %v57 = vmul.f32 %v55, 1.442695
    %v58 = vpow.pop %v57
    %v59 = vmul.f32 %v56, 1.442695
    %v60 = vpow.pop %v59
    %v61 = vmul.f32 %v58, %v39
    %v62 = vmul.f32 %v60, %v39
    %v63 = vsel %vm41, %v61, 0.0
    %64 = vadd.xlane.f32.xlu0 %v63
    %v65 = vpop.xlane.xlu0 %64
    %v66 = vsel %vm41, %v62, 0.0
    %67 = vadd.xlane.f32.xlu0 %v66
    %v68 = vpop.xlane.xlu0 %67
    %v69 = vsub.f32 %v44, %v51
    %v70 = vmul.f32 %v69, 1.442695
    %v71 = vpow.pop %v70
    %v72 = vsub.f32 %v48, %v54
    %v73 = vmul.f32 %v72, 1.442695
    %v74 = vpow.pop %v73
    %v75 = vadd.f32 %v65, %v71
    %v76 = vadd.f32 %v68, %v74
    %v77 = vrcp.pop %v76
    %v78 = vmul.f32 %v76, %v77
    %v79 = vsub.f32 1.0, %v78
    %v80 = vmul.f32 %v77, %v79
    %v81 = vadd.f32 %v77, %v80
    %vm82 = vweird.f32 %v76
    %vm83 = vweird.f32 %v77
    %vm84 = vmor %vm82, %vm83
    %v85 = vsel %vm84, %v77, %v81
    %v86 = vand.u32 2147483647, %v76
    %vm87 = vcmp.eq.f32.partialorder %v86, 8.507059e+37
    %v88 = vand.u32 %v76, 2147483648
    %v89 = vor.u32 1.1754944e-38, %v88
    %v90 = vsel %vm87, %v89, %v85
    %v91 = vmul.f32 %v74, %v90
    %v92 = vlog2.pop %v75
    %v93 = vmul.f32 %v92, 0.6931472
    %v94 = vsub.f32 %v69, %v93
    %v95 = vlog2.pop %v65
    %v96 = vmul.f32 %v95, 0.6931472
    %v97 = vsub.f32 %v55, %v96
    %v98 = vmul.f32 %v62, %v97
    %v99 = vsel %vm41, %v98, 0.0
    %100 = vadd.xlane.f32.xlu0 %v99
    %v101 = vpop.xlane.xlu0 %100
    %v102 = vrcp.pop %v68
    %v103 = vmul.f32 %v68, %v102
    %v104 = vsub.f32 1.0, %v103
    %v105 = vmul.f32 %v102, %v104
    %v106 = vadd.f32 %v102, %v105
    %vm107 = vweird.f32 %v68
    %vm108 = vweird.f32 %v102
    %vm109 = vmor %vm107, %vm108
    %v110 = vsel %vm109, %v102, %v106
    %v111 = vand.u32 2147483647, %v68
    %vm112 = vcmp.eq.f32.partialorder %v111, 8.507059e+37
    %v113 = vand.u32 %v68, 2147483648
    %v114 = vor.u32 1.1754944e-38, %v113
    %v115 = vsel %vm112, %v114, %v110
    %v116 = vmul.f32 %v101, %v115
    %v117 = vadd.f32 %v116, -1.3815511e-05
    %v118 = vadd.f32 %v91, 1.0
    %v119 = vsub.f32 0.0, %v118
    %v120 = vmul.f32 %v119, %v94
    %v121 = vsub.f32 %v120, %v117
    %vm122 = vcmask 7168
    %123 = vst.msk [vmem:[%s3] sm:$0xff] %vm122, %v121
    // Predicated region
    $region18: #{tpu_custom_call.1} parent=1 // pred_check
      _
    $region19: #{tpu_custom_call.1} parent=1 // pred_check_branch
      %125 = sbr.rel (0) target = $region21
    $region20: #{tpu_custom_call.1} parent=1 // pred_region
      _
    $region21: #{tpu_custom_call.1} parent=1 // pred_fallthru
      _
    // Predicated region
    $region22: #{tpu_custom_call.1} parent=1 // pred_check
      _
    $region23: #{tpu_custom_call.1} parent=1 // pred_check_branch
      %127 = sbr.rel (0) target = $region25
    $region24: #{tpu_custom_call.1} parent=1 // pred_region
      _
    $region25: #{tpu_custom_call.1} parent=1 // pred_fallthru
      _
    %128 = vsyncpa [#allocation3], 1

</llo_original>
